<compile_context>
chip_gen: v5e
topology: v5e:2x2
jax: 0.10.0
libtpu: 0.0.40
codegen_flags: <defaults>
</compile_context>

<pallas_src>
import functools

import jax
import jax.numpy as jnp
from jax.experimental import pallas as pl
from jax.experimental.pallas import tpu as pltpu

NEG_SLOPE_ATT = 0.2    # GATConv internal LeakyReLU slope (PyG default)
NEG_SLOPE_OUT = 0.01   # F.leaky_relu default slope
_MASK = -1e30          # finite "minus infinity" (avoids inf-inf NaNs)
APAD = 128             # lane padding for the dst attention-logit array
HPAD = 8               # sublane padding for the transposed src logit array


def _round_up(x, m):
    return (x + m - 1) // m * m


# ----------------------------------------------------------------------------
# Kernel 1: projection  xp = x @ W  +  per-head attention logits (MXU only)
# ----------------------------------------------------------------------------
def _project_kernel(x_ref, w_ref, attd_ref, atts_ref,
                    xp3_ref, ad_ref, asT_ref, *, heads, out_ch):
    """x_ref: [TM, D], w_ref: [D, H*C]
       attd_ref: [H*C, APAD] block-diagonal dst-attention matrix
       atts_ref: [HPAD, H*C] block-diagonal src-attention matrix (row-major)
       xp3_ref:  [H, TM, C]  per-head projected features
       ad_ref:   [TM, APAD]  a_dst[n, h] in column h
       asT_ref:  [HPAD, TM]  a_src[n, h] in row h (pre-transposed)"""
    x = x_ref[...].astype(jnp.float32)
    w = w_ref[...].astype(jnp.float32)
    xp = jnp.dot(x, w, preferred_element_type=jnp.float32)          # [TM, H*C]

    # dst logits: one MXU matmul instead of per-head cross-lane reductions.
    ad_ref[...] = jnp.dot(xp, attd_ref[...],
                          preferred_element_type=jnp.float32)        # [TM, APAD]
    # src logits, produced already transposed: A_src [HPAD,H*C] @ xp^T.
    asT_ref[...] = jax.lax.dot_general(
        atts_ref[...], xp, (((1,), (1,)), ((), ())),
        preferred_element_type=jnp.float32)                          # [HPAD, TM]

    for h in range(heads):                                           # static
        xp3_ref[h] = xp[:, h * out_ch:(h + 1) * out_ch]


# ----------------------------------------------------------------------------
# Kernel 2: masked online-softmax attention + aggregation + leaky_relu
# ----------------------------------------------------------------------------
def _gat_attn_kernel(alpha_dst_ref, alpha_srcT_ref, xp3_ref, adj_ref, bias_ref,
                     out_ref, m_sc, l_sc, acc_sc, *, heads):
    """Grid: (dst tiles i [parallel], src tiles k [arbitrary, reduction]).
       alpha_dst_ref: [TM, APAD]   alpha_srcT_ref: [HPAD, TK]
       xp3_ref: [H, TK, C]         adj_ref: [TM, TK] int8
       out_ref: [TM, C]            scratch: m/l [H,TM,1], acc [H,TM,C]"""
    k = pl.program_id(1)

    @pl.when(k == 0)
    def _init():
        m_sc[...] = jnp.full_like(m_sc, _MASK)
        l_sc[...] = jnp.zeros_like(l_sc)
        acc_sc[...] = jnp.zeros_like(acc_sc)

    adj_f = adj_ref[...].astype(jnp.float32)       # int8 in HBM -> f32 in vregs
    masked = adj_f == 0.0                          # [TM, TK]
    a_dst = alpha_dst_ref[...]                     # [TM, APAD]
    a_srcT = alpha_srcT_ref[...]                   # [HPAD, TK]

    for h in range(heads):                         # heads=3, unrolled
        ad = a_dst[:, h:h + 1]                     # [TM, 1]
        asr = a_srcT[h:h + 1, :]                   # [1, TK]
        e = ad + asr                               # [TM, TK]
        e = jnp.where(e > 0, e, NEG_SLOPE_ATT * e)
        e = jnp.where(masked, _MASK, e)            # single masking pass

        m_prev = m_sc[h]                                          # [TM, 1]
        m_new = jnp.maximum(m_prev, jnp.max(e, axis=-1, keepdims=True))
        corr = jnp.exp(m_prev - m_new)
        p = jnp.exp(e - m_new)                     # masked entries underflow to 0
        l_sc[h] = corr * l_sc[h] + jnp.sum(p, axis=-1, keepdims=True)
        acc_sc[h] = corr * acc_sc[h] + jnp.dot(
            p, xp3_ref[h], preferred_element_type=jnp.float32)
        m_sc[h] = m_new

    @pl.when(k == pl.num_programs(1) - 1)
    def _finalize():
        acc = acc_sc[0] * pl.reciprocal(l_sc[0], approx=True)
        for h in range(1, heads):
            acc = acc + acc_sc[h] * pl.reciprocal(l_sc[h], approx=True)
        out = acc * (1.0 / heads) + bias_ref[...]              # mean heads + bias
        out = jnp.where(out > 0, out, NEG_SLOPE_OUT * out)     # F.leaky_relu
        out_ref[...] = out.astype(out_ref.dtype)


# ----------------------------------------------------------------------------
# Wrapper
# ----------------------------------------------------------------------------
def gat_conv_pallas(x, w, att_src, att_dst, bias, adj, *, heads, out_ch,
                    tm=128, tk=256):
    """Fused GATConv (dense int8 adjacency) + outer leaky_relu."""
    n, d = x.shape
    hc = heads * out_ch
    assert max(tm, tk) % min(tm, tk) == 0
    n_pad = _round_up(n, max(tm, tk))
    tm = min(tm, n_pad)
    tk = min(tk, n_pad)

    x_p = jnp.pad(x.astype(jnp.float32), ((0, n_pad - n), (0, 0)))
    adj_p = jnp.pad(adj.astype(jnp.int8), ((0, n_pad - n), (0, n_pad - n)))

    # Block-diagonal attention-projection matrices (built once, lane/sublane
    # padded so the projection outputs are dense, unmasked stores).
    att_dst_cat = jnp.zeros((hc, APAD), jnp.float32)
    att_src_rows = jnp.zeros((HPAD, hc), jnp.float32)
    for h in range(heads):
        att_dst_cat = att_dst_cat.at[h * out_ch:(h + 1) * out_ch, h].set(att_dst[h])
        att_src_rows = att_src_rows.at[h, h * out_ch:(h + 1) * out_ch].set(att_src[h])

    cparams = pltpu.CompilerParams(
        dimension_semantics=("parallel",),
        vmem_limit_bytes=32 * 1024 * 1024)

    xp3, alpha_dst, alpha_srcT = pl.pallas_call(
        functools.partial(_project_kernel, heads=heads, out_ch=out_ch),
        out_shape=(
            jax.ShapeDtypeStruct((heads, n_pad, out_ch), jnp.float32),
            jax.ShapeDtypeStruct((n_pad, APAD), jnp.float32),
            jax.ShapeDtypeStruct((HPAD, n_pad), jnp.float32),
        ),
        grid_spec=pltpu.PrefetchScalarGridSpec(
            num_scalar_prefetch=0,
            grid=(n_pad // tm,),
            in_specs=[
                pl.BlockSpec((tm, d), lambda i: (i, 0)),
                pl.BlockSpec((d, hc), lambda i: (0, 0)),
                pl.BlockSpec((hc, APAD), lambda i: (0, 0)),
                pl.BlockSpec((HPAD, hc), lambda i: (0, 0)),
            ],
            out_specs=(
                pl.BlockSpec((heads, tm, out_ch), lambda i: (0, i, 0)),
                pl.BlockSpec((tm, APAD), lambda i: (i, 0)),
                pl.BlockSpec((HPAD, tm), lambda i: (0, i)),
            ),
        ),
        compiler_params=cparams,
    )(x_p, w.astype(jnp.float32), att_dst_cat, att_src_rows)

    out_p = pl.pallas_call(
        functools.partial(_gat_attn_kernel, heads=heads),
        out_shape=jax.ShapeDtypeStruct((n_pad, out_ch), jnp.float32),
        grid_spec=pltpu.PrefetchScalarGridSpec(
            num_scalar_prefetch=0,
            grid=(n_pad // tm, n_pad // tk),
            in_specs=[
                pl.BlockSpec((tm, APAD), lambda i, k: (i, 0)),
                pl.BlockSpec((HPAD, tk), lambda i, k: (0, k)),
                pl.BlockSpec((heads, tk, out_ch), lambda i, k: (0, k, 0)),
                pl.BlockSpec((tm, tk), lambda i, k: (i, k)),        # int8 adj
                pl.BlockSpec((1, out_ch), lambda i, k: (0, 0)),
            ],
            out_specs=pl.BlockSpec((tm, out_ch), lambda i, k: (i, 0)),
            scratch_shapes=[
                pltpu.VMEM((heads, tm, 1), jnp.float32),   # running max
                pltpu.VMEM((heads, tm, 1), jnp.float32),   # running denom
                pltpu.VMEM((heads, tm, out_ch), jnp.float32),  # running acc
            ],
        ),
        compiler_params=pltpu.CompilerParams(
            dimension_semantics=("parallel", "arbitrary"),
            vmem_limit_bytes=32 * 1024 * 1024),
    )(alpha_dst, alpha_srcT, xp3, adj_p, bias.astype(jnp.float32))

    return out_p[:n]


# ----------------------------------------------------------------------------
# Module equivalent (glue in plain JAX)
# ----------------------------------------------------------------------------
class GATPallas:
    def __init__(self, edge_index, dim_id, num_user, num_item, weight_decay,
                 dropout, key):
        self.num_user = num_user
        self.num_item = num_item
        self.dim_id = dim_id
        self.heads = 3
        self.dropout = dropout
        self.reg_weight = weight_decay
        self.edge_index = jnp.asarray(edge_index, jnp.int32)  # [2, E]

        n = num_user + num_item
        k = jax.random.split(key, 5)
        std_emb = (2.0 / (n + dim_id)) ** 0.5                  # xavier_normal_
        self.id_embedding = std_emb * jax.random.normal(k[0], (n, dim_id),
                                                        jnp.float32)
        std_w = (2.0 / (dim_id + self.heads * dim_id)) ** 0.5
        self.w = std_w * jax.random.normal(k[1], (dim_id, self.heads * dim_id),
                                           jnp.float32)
        std_a = (2.0 / (1 + dim_id)) ** 0.5
        self.att_src = std_a * jax.random.normal(k[2], (self.heads, dim_id),
                                                 jnp.float32)
        self.att_dst = std_a * jax.random.normal(k[3], (self.heads, dim_id),
                                                 jnp.float32)
        self.bias = jnp.zeros((1, dim_id), jnp.float32)

    def _dense_adj(self, key):
        """dropout_adj + cat(reverse) + self loops -> dense int8 mask [N, N]."""
        # TODO(synk): replace the dense N^2 adjacency with a block-sparse CSR
        # formulation via PrefetchScalarGridSpec (skip empty source tiles).
        n = self.num_user + self.num_item
        src, dst = self.edge_index[0], self.edge_index[1]
        keep = jax.random.bernoulli(
            key, 1.0 - self.dropout, (self.edge_index.shape[1],)
        ).astype(jnp.int32)
        adj = jnp.zeros((n, n), jnp.int32)
        adj = adj.at[dst, src].max(keep)          # edge src -> dst
        adj = jnp.maximum(adj, adj.T)             # concatenated reverse edges
        diag = jnp.arange(n)
        adj = adj.at[diag, diag].set(1)           # add_self_loops
        return adj.astype(jnp.int8)               # int8: 4x less HBM traffic

    def forward(self, user_nodes, pos_item_nodes, neg_item_nodes, key):
        adj = self._dense_adj(key)
        x = gat_conv_pallas(self.id_embedding, self.w, self.att_src,
                            self.att_dst, self.bias, adj,
                            heads=self.heads, out_ch=self.dim_id)
        self.result_embed = x
        user_t = x[user_nodes]
        pos_t = x[pos_item_nodes]
        neg_t = x[neg_item_nodes]
        # Row-wise dot products: trivial work, done in plain jnp (a dedicated
        # pallas_call is pure overhead per review).
        pos_scores = jnp.sum(user_t * pos_t, axis=1)
        neg_scores = jnp.sum(user_t * neg_t, axis=1)
        return pos_scores, neg_scores

    # TODO(synk): loss / accuracy / full_accuracy are host-side evaluation
    # loops (top-k ranking, dict lookups) and are not implemented as kernels.


# ----------------------------------------------------------------------------
# Pure-JAX reference for a sanity check
# ----------------------------------------------------------------------------
def _reference(model, adj, user_nodes, pos_item_nodes, neg_item_nodes):
    xp = model.id_embedding @ model.w
    n = xp.shape[0]
    acc = jnp.zeros((n, model.dim_id), jnp.float32)
    for h in range(model.heads):
        xh = xp[:, h * model.dim_id:(h + 1) * model.dim_id]
        a_src = (xh * model.att_src[h]).sum(-1)
        a_dst = (xh * model.att_dst[h]).sum(-1)
        e = a_dst[:, None] + a_src[None, :]
        e = jnp.where(e > 0, e, NEG_SLOPE_ATT * e)
        e = jnp.where(adj > 0, e, -jnp.inf)
        attn = jax.nn.softmax(e, axis=-1)
        acc = acc + attn @ xh
    out = acc / model.heads + model.bias
    out = jnp.where(out > 0, out, NEG_SLOPE_OUT * out)
    u, p, ng = out[user_nodes], out[pos_item_nodes], out[neg_item_nodes]
    return (u * p).sum(-1), (u * ng).sum(-1)


# ----------------------------------------------------------------------------
if __name__ == "__main__":
    key = jax.random.PRNGKey(0)
    k_model, k_edges, k_drop, k_batch = jax.random.split(key, 4)

    num_user, num_item, dim_id = 8, 8, 32
    batch = 8
    n_edges = 20

    users = jax.random.randint(k_edges, (n_edges,), 0, num_user)
    items = num_user + jax.random.randint(
        jax.random.fold_in(k_edges, 1), (n_edges,), 0, num_item)
    edge_index = jnp.stack([users, items], axis=0).astype(jnp.int32)

    model = GATPallas(edge_index, dim_id, num_user, num_item,
                      weight_decay=1e-4, dropout=0.1, key=k_model)

    user_nodes = jax.random.randint(k_batch, (batch,), 0, num_user)
    pos_item_nodes = num_user + jax.random.randint(
        jax.random.fold_in(k_batch, 1), (batch,), 0, num_item)
    neg_item_nodes = num_user + jax.random.randint(
        jax.random.fold_in(k_batch, 2), (batch,), 0, num_item)

    pos_scores, neg_scores = model.forward(user_nodes, pos_item_nodes,
                                           neg_item_nodes, k_drop)
    jax.block_until_ready((pos_scores, neg_scores))

    # sanity check vs pure-JAX reference (same dropout mask)
    adj = model._dense_adj(k_drop)
    ref_pos, ref_neg = _reference(model, adj, user_nodes, pos_item_nodes,
                                  neg_item_nodes)
    assert jnp.allclose(pos_scores, ref_pos, rtol=5e-3, atol=5e-3)
    assert jnp.allclose(neg_scores, ref_neg, rtol=5e-3, atol=5e-3)

    print("KERNEL_OK")
</pallas_src>

<mosaic_0001>
module attributes {stable_mosaic.version = 11 : i64} {
  func.func @_project_kernel(%arg0: i32, %arg1: memref<128x32xf32, #tpu.memory_space<vmem>>, %arg2: memref<32x96xf32, #tpu.memory_space<vmem>>, %arg3: memref<96x128xf32, #tpu.memory_space<vmem>>, %arg4: memref<8x96xf32, #tpu.memory_space<vmem>>, %arg5: memref<3x128x32xf32, #tpu.memory_space<vmem>>, %arg6: memref<128x128xf32, #tpu.memory_space<vmem>>, %arg7: memref<8x128xf32, #tpu.memory_space<vmem>>) attributes {dimension_semantics = [#tpu.dimension_semantics<parallel>], iteration_bounds = array<i64: 2>, scalar_prefetch = 0 : i64, scratch_operands = 0 : i64, tpu.core_type = #tpu.core_type<tc>, window_params = [{transform_indices = @transform_0, window_bounds = array<i64: 128, 32>}, {pipeline_mode = #tpu.pipeline_mode<synchronous>, transform_indices = @transform_1, window_bounds = array<i64: 32, 96>}, {pipeline_mode = #tpu.pipeline_mode<synchronous>, transform_indices = @transform_2, window_bounds = array<i64: 96, 128>}, {pipeline_mode = #tpu.pipeline_mode<synchronous>, transform_indices = @transform_3, window_bounds = array<i64: 8, 96>}, {transform_indices = @transform_4, window_bounds = array<i64: 3, 128, 32>}, {transform_indices = @transform_5, window_bounds = array<i64: 128, 128>}, {transform_indices = @transform_6, window_bounds = array<i64: 8, 128>}]} {
    %c0 = arith.constant 0 : index
    %c0_0 = arith.constant 0 : index
    %0 = vector.load %arg1[%c0, %c0_0] : memref<128x32xf32, #tpu.memory_space<vmem>>, vector<128x32xf32>
    %c0_1 = arith.constant 0 : index
    %c0_2 = arith.constant 0 : index
    %1 = vector.load %arg2[%c0_1, %c0_2] : memref<32x96xf32, #tpu.memory_space<vmem>>, vector<32x96xf32>
    %cst = arith.constant dense<0.000000e+00> : vector<128x96xf32>
    %2 = tpu.matmul %0, %1, %cst {dimension_numbers = #tpu.dot_dimension_numbers<[1], [0], [0], [1], [0, 0, 1, 1], [], []>} : vector<128x32xf32>, vector<32x96xf32>, vector<128x96xf32> -> vector<128x96xf32>
    %c0_3 = arith.constant 0 : index
    %c0_4 = arith.constant 0 : index
    %3 = vector.load %arg3[%c0_3, %c0_4] : memref<96x128xf32, #tpu.memory_space<vmem>>, vector<96x128xf32>
    %cst_5 = arith.constant dense<0.000000e+00> : vector<128x128xf32>
    %4 = tpu.matmul %2, %3, %cst_5 {dimension_numbers = #tpu.dot_dimension_numbers<[1], [0], [0], [1], [0, 0, 1, 1], [], []>} : vector<128x96xf32>, vector<96x128xf32>, vector<128x128xf32> -> vector<128x128xf32>
    %c0_6 = arith.constant 0 : index
    %c0_7 = arith.constant 0 : index
    %5 = vector.load %arg6[%c0_6, %c0_7] : memref<128x128xf32, #tpu.memory_space<vmem>>, vector<128x128xf32>
    tpu.vector_store %arg6[%c0_6, %c0_7], %4 {strides = array<i32>} : memref<128x128xf32, #tpu.memory_space<vmem>>, vector<128x128xf32>,
    %c0_8 = arith.constant 0 : index
    %c0_9 = arith.constant 0 : index
    %6 = vector.load %arg4[%c0_8, %c0_9] : memref<8x96xf32, #tpu.memory_space<vmem>>, vector<8x96xf32>
    %cst_10 = arith.constant dense<0.000000e+00> : vector<8x128xf32>
    %7 = tpu.matmul %6, %2, %cst_10 {dimension_numbers = #tpu.dot_dimension_numbers<[1], [1], [0], [0], [0, 0, 1, 0], [], []>} : vector<8x96xf32>, vector<128x96xf32>, vector<8x128xf32> -> vector<8x128xf32>
    %c0_11 = arith.constant 0 : index
    %c0_12 = arith.constant 0 : index
    %8 = vector.load %arg7[%c0_11, %c0_12] : memref<8x128xf32, #tpu.memory_space<vmem>>, vector<8x128xf32>
    tpu.vector_store %arg7[%c0_11, %c0_12], %7 {strides = array<i32>} : memref<8x128xf32, #tpu.memory_space<vmem>>, vector<8x128xf32>,
    %9 = vector.extract_strided_slice %2 {offsets = [0, 0], sizes = [128, 32], strides = [1, 1]} : vector<128x96xf32> to vector<128x32xf32>
    %c0_13 = arith.constant 0 : index
    %c0_14 = arith.constant 0 : index
    %c0_15 = arith.constant 0 : index
    %10 = vector.load %arg5[%c0_13, %c0_14, %c0_15] : memref<3x128x32xf32, #tpu.memory_space<vmem>>, vector<1x128x32xf32>
    %11 = vector.shape_cast %10 : vector<1x128x32xf32> to vector<128x32xf32>
    %12 = vector.shape_cast %9 : vector<128x32xf32> to vector<1x128x32xf32>
    tpu.vector_store %arg5[%c0_13, %c0_14, %c0_15], %12 {strides = array<i32>} : memref<3x128x32xf32, #tpu.memory_space<vmem>>, vector<1x128x32xf32>,
    %13 = vector.extract_strided_slice %2 {offsets = [0, 32], sizes = [128, 32], strides = [1, 1]} : vector<128x96xf32> to vector<128x32xf32>
    %c1 = arith.constant 1 : index
    %c0_16 = arith.constant 0 : index
    %c0_17 = arith.constant 0 : index
    %14 = vector.load %arg5[%c1, %c0_16, %c0_17] : memref<3x128x32xf32, #tpu.memory_space<vmem>>, vector<1x128x32xf32>
    %15 = vector.shape_cast %14 : vector<1x128x32xf32> to vector<128x32xf32>
    %16 = vector.shape_cast %13 : vector<128x32xf32> to vector<1x128x32xf32>
    tpu.vector_store %arg5[%c1, %c0_16, %c0_17], %16 {strides = array<i32>} : memref<3x128x32xf32, #tpu.memory_space<vmem>>, vector<1x128x32xf32>,
    %17 = vector.extract_strided_slice %2 {offsets = [0, 64], sizes = [128, 32], strides = [1, 1]} : vector<128x96xf32> to vector<128x32xf32>
    %c2 = arith.constant 2 : index
    %c0_18 = arith.constant 0 : index
    %c0_19 = arith.constant 0 : index
    %18 = vector.load %arg5[%c2, %c0_18, %c0_19] : memref<3x128x32xf32, #tpu.memory_space<vmem>>, vector<1x128x32xf32>
    %19 = vector.shape_cast %18 : vector<1x128x32xf32> to vector<128x32xf32>
    %20 = vector.shape_cast %17 : vector<128x32xf32> to vector<1x128x32xf32>
    tpu.vector_store %arg5[%c2, %c0_18, %c0_19], %20 {strides = array<i32>} : memref<3x128x32xf32, #tpu.memory_space<vmem>>, vector<1x128x32xf32>,
    return
  }
  func.func @transform_0(%arg0: i32) -> (i32, i32) {
    %c0_i32 = arith.constant 0 : i32
    %c0_i32_0 = arith.constant 0 : i32
    return %arg0, %c0_i32 : i32, i32
  }
  func.func @transform_1(%arg0: i32) -> (i32, i32) {
    %c0_i32 = arith.constant 0 : i32
    %c0_i32_0 = arith.constant 0 : i32
    %c0_i32_1 = arith.constant 0 : i32
    return %c0_i32, %c0_i32_0 : i32, i32
  }
  func.func @transform_2(%arg0: i32) -> (i32, i32) {
    %c0_i32 = arith.constant 0 : i32
    %c0_i32_0 = arith.constant 0 : i32
    %c0_i32_1 = arith.constant 0 : i32
    return %c0_i32, %c0_i32_0 : i32, i32
  }
  func.func @transform_3(%arg0: i32) -> (i32, i32) {
    %c0_i32 = arith.constant 0 : i32
    %c0_i32_0 = arith.constant 0 : i32
    %c0_i32_1 = arith.constant 0 : i32
    return %c0_i32, %c0_i32_0 : i32, i32
  }
  func.func @transform_4(%arg0: i32) -> (i32, i32, i32) {
    %c0_i32 = arith.constant 0 : i32
    %c0_i32_0 = arith.constant 0 : i32
    %c0_i32_1 = arith.constant 0 : i32
    return %c0_i32, %arg0, %c0_i32_0 : i32, i32, i32
  }
  func.func @transform_5(%arg0: i32) -> (i32, i32) {
    %c0_i32 = arith.constant 0 : i32
    %c0_i32_0 = arith.constant 0 : i32
    return %arg0, %c0_i32 : i32, i32
  }
  func.func @transform_6(%arg0: i32) -> (i32, i32) {
    %c0_i32 = arith.constant 0 : i32
    %c0_i32_0 = arith.constant 0 : i32
    return %c0_i32, %arg0 : i32, i32
  }
}

</mosaic_0001>

<llo_original>
// kernel: tpu_custom_call.1
$region0: #{tpu_custom_call.1}
  #allocation0 [shape = 'u32[]', space=smem, size = 0x4, offset = 0x4, fixed_abs, tag = 'smem constant byte address 0x4 - core index']
  #allocation1 [shape = 'u32[72,128]{1,0:T(1,128)}', space=vmem, size = 0x9000, scoped, tag = 'internal scratch']
  %s0 = inlined_call_operand.vmem [shape: f32[256,32], index: 0, kind: input, shape index: {}]
  %s1 = inlined_call_operand.vmem [shape: f32[32,96], index: 1, kind: input, shape index: {}]
  %s2 = inlined_call_operand.vmem [shape: f32[96,128], index: 2, kind: input, shape index: {}]
  %s3 = inlined_call_operand.vmem [shape: f32[8,96], index: 3, kind: input, shape index: {}]
  %s4 = inlined_call_operand.vmem [shape: f32[3,256,32], index: 4, kind: output, shape index: {0}]
  %s5 = inlined_call_operand.hbm [shape: f32[256,128], index: 5, kind: output, shape index: {1}]
  %s6 = inlined_call_operand.hbm [shape: f32[8,256], index: 6, kind: output, shape index: {2}]
  %7 = xla_tuple %s4, %s5, %s6
  %s8 = sld [smem:[#allocation0]]
  $region99: #{tpu_custom_call.1} parent=0
    _
  %s10 = ssub.s32 1, %s8
  %s11 = scalar_select 0, %s10, %s8
  $region1: #{tpu_custom_call.1} parent=0
    #allocation2 [shape = 'u8[393216]{0}', space=vmem, size = 0x60000, scoped, tag = 'output window, operand 0']
    #allocation3 [shape = 'u8[131072]{0}', space=vmem, size = 0x20000, scoped, tag = 'output window, operand 1']
    #allocation4 [shape = 's32[2]{0}', space=sflag, size = 0x8, scoped, tag = 'scoped memory for tpu_custom_call.1']
    #allocation5 [shape = 'u8[8192]{0}', space=vmem, size = 0x2000, scoped, tag = 'output window, operand 2']
    #allocation6 [shape = 's32[2]{0}', space=sflag, size = 0x8, scoped, tag = 'scoped memory for tpu_custom_call.1']
    %12 = vsyncpa [#allocation4], 0
    %s13 = scalar_lea.sflag [#allocation4], 1
    %14 = vsyncpa %s13, 0
    %15 = vsyncpa [#allocation6], 0
    %s16 = scalar_lea.sflag [#allocation6], 1
    %17 = vsyncpa %s16, 0
    loop: start=0, step=1, limit=4
    $region2: #{tpu_custom_call.1} parent=1 // loop_pre_header
      _
    $region3: #{tpu_custom_call.1} parent=1 // loop_header
      %s19 = sphi 0, %s23
      %p20 = scmp.ge.s32.totalorder %s19, 4
      %s29 = sphi 0, %s31
      %s32 = sphi 0, %s29
      %s33 = sphi 0, %s32
      %s49 = sphi 0, %s33
      %s53 = sphi 0, %s53
      %s55 = sphi 0, %s53
      %s56 = sphi 0, %s55
      %s70 = sphi 0, %s56
      %s74 = sphi 0, %s74
      %s76 = sphi 0, %s74
      %s77 = sphi 0, %s76
      %s91 = sphi 0, %s77
      %s95 = sphi 0, %s95
      %s97 = sphi 0, %s95
      %s98 = sphi 0, %s97
      %s112 = sphi 0, %s98
      %s118 = sphi 0, %s120
      %s121 = sphi 0, %s118
      %s122 = sphi 0, %s121
      %s138 = sphi 0, %s122
      %s144 = sphi 0, %s146
      %s147 = sphi 0, %s144
      %s148 = sphi 0, %s147
      %s164 = sphi 0, %s148
      %s170 = sphi 0, %s172
      %s173 = sphi 0, %s170
      %s174 = sphi 0, %s173
      %s190 = sphi 0, %s174
    $region4: #{tpu_custom_call.1} parent=1 // loop_header_branch
      %22 = sbr.rel (%p20) target = $region8
    $region5: #{tpu_custom_call.1} parent=1 // loop_body
      %s24 = ssub.s32 %s19, 1
      %s25 = ssub.s32 %s19, 2
      %s26 = sadd.s32 %s19, 1
      %s27 = ssub.s32 %s19, %s26
      %p28 = scmp.eq.s32.totalorder %s27, 0
      %s30 = sadd.s32 %s29, 1
      %s31 = scalar_select %p28, %s29, %s30
      %p34 = pneg %p28
      %p35 = scmp.eq.s32.totalorder %s19, 1
      %p36 = por %p34, %p35
      %p37 = scmp.ne.s32.totalorder %s29, %s32
      %p38 = scmp.eq.s32.totalorder %s19, 0
      %p39 = por %p37, %p38
      %p40 = scmp.ne.s32.totalorder %s29, %s32
      %p41 = scmp.eq.s32.totalorder %s24, 1
      %p42 = por %p40, %p41
      %p43 = scmp.ne.s32.totalorder %s32, %s33
      %p44 = scmp.eq.s32.totalorder %s24, 0
      %p45 = por %p43, %p44
      %p46 = scmp.ne.s32.totalorder %s32, %s33
      %p47 = scmp.eq.s32.totalorder %s25, 1
      %p48 = por %p46, %p47
      %p50 = scmp.ne.s32.totalorder %s33, %s49
      %p51 = scmp.eq.s32.totalorder %s25, 0
      %p52 = por %p50, %p51
      %s54 = sadd.s32 %s53, 1
      %p57 = scmp.eq.s32.totalorder %s19, 1
      %p58 = scmp.ne.s32.totalorder %s53, %s55
      %p59 = scmp.eq.s32.totalorder %s19, 0
      %p60 = por %p58, %p59
      %p61 = scmp.ne.s32.totalorder %s53, %s55
      %p62 = scmp.eq.s32.totalorder %s24, 1
      %p63 = por %p61, %p62
      %p64 = scmp.ne.s32.totalorder %s55, %s56
      %p65 = scmp.eq.s32.totalorder %s24, 0
      %p66 = por %p64, %p65
      %p67 = scmp.ne.s32.totalorder %s55, %s56
      %p68 = scmp.eq.s32.totalorder %s25, 1
      %p69 = por %p67, %p68
      %p71 = scmp.ne.s32.totalorder %s56, %s70
      %p72 = scmp.eq.s32.totalorder %s25, 0
      %p73 = por %p71, %p72
      %s75 = sadd.s32 %s74, 1
      %p78 = scmp.eq.s32.totalorder %s19, 1
      %p79 = scmp.ne.s32.totalorder %s74, %s76
      %p80 = scmp.eq.s32.totalorder %s19, 0
      %p81 = por %p79, %p80
      %p82 = scmp.ne.s32.totalorder %s74, %s76
      %p83 = scmp.eq.s32.totalorder %s24, 1
      %p84 = por %p82, %p83
      %p85 = scmp.ne.s32.totalorder %s76, %s77
      %p86 = scmp.eq.s32.totalorder %s24, 0
      %p87 = por %p85, %p86
      %p88 = scmp.ne.s32.totalorder %s76, %s77
      %p89 = scmp.eq.s32.totalorder %s25, 1
      %p90 = por %p88, %p89
      %p92 = scmp.ne.s32.totalorder %s77, %s91
      %p93 = scmp.eq.s32.totalorder %s25, 0
      %p94 = por %p92, %p93
      %s96 = sadd.s32 %s95, 1
      %p99 = scmp.eq.s32.totalorder %s19, 1
      %p100 = scmp.ne.s32.totalorder %s95, %s97
      %p101 = scmp.eq.s32.totalorder %s19, 0
      %p102 = por %p100, %p101
      %p103 = scmp.ne.s32.totalorder %s95, %s97
      %p104 = scmp.eq.s32.totalorder %s24, 1
      %p105 = por %p103, %p104
      %p106 = scmp.ne.s32.totalorder %s97, %s98
      %p107 = scmp.eq.s32.totalorder %s24, 0
      %p108 = por %p106, %p107
      %p109 = scmp.ne.s32.totalorder %s97, %s98
      %p110 = scmp.eq.s32.totalorder %s25, 1
      %p111 = por %p109, %p110
      %p113 = scmp.ne.s32.totalorder %s98, %s112
      %p114 = scmp.eq.s32.totalorder %s25, 0
      %p115 = por %p113, %p114
      %s116 = ssub.s32 %s19, %s26
      %p117 = scmp.eq.s32.totalorder %s116, 0
      %s119 = sadd.s32 %s118, 1
      %s120 = scalar_select %p117, %s118, %s119
      %p123 = pneg %p117
      %p124 = scmp.eq.s32.totalorder %s19, 1
      %p125 = por %p123, %p124
      %p126 = scmp.ne.s32.totalorder %s118, %s121
      %p127 = scmp.eq.s32.totalorder %s19, 0
      %p128 = por %p126, %p127
      %p129 = scmp.ne.s32.totalorder %s118, %s121
      %p130 = scmp.eq.s32.totalorder %s24, 1
      %p131 = por %p129, %p130
      %p132 = scmp.ne.s32.totalorder %s121, %s122
      %p133 = scmp.eq.s32.totalorder %s24, 0
      %p134 = por %p132, %p133
      %p135 = scmp.ne.s32.totalorder %s121, %s122
      %p136 = scmp.eq.s32.totalorder %s25, 1
      %p137 = por %p135, %p136
      %p139 = scmp.ne.s32.totalorder %s122, %s138
      %p140 = scmp.eq.s32.totalorder %s25, 0
      %p141 = por %p139, %p140
      %s142 = ssub.s32 %s19, %s26
      %p143 = scmp.eq.s32.totalorder %s142, 0
      %s145 = sadd.s32 %s144, 1
      %s146 = scalar_select %p143, %s144, %s145
      %p149 = pneg %p143
      %p150 = scmp.eq.s32.totalorder %s19, 1
      %p151 = por %p149, %p150
      %p152 = scmp.ne.s32.totalorder %s144, %s147
      %p153 = scmp.eq.s32.totalorder %s19, 0
      %p154 = por %p152, %p153
      %p155 = scmp.ne.s32.totalorder %s144, %s147
      %p156 = scmp.eq.s32.totalorder %s24, 1
      %p157 = por %p155, %p156
      %p158 = scmp.ne.s32.totalorder %s147, %s148
      %p159 = scmp.eq.s32.totalorder %s24, 0
      %p160 = por %p158, %p159
      %p161 = scmp.ne.s32.totalorder %s147, %s148
      %p162 = scmp.eq.s32.totalorder %s25, 1
      %p163 = por %p161, %p162
      %p165 = scmp.ne.s32.totalorder %s148, %s164
      %p166 = scmp.eq.s32.totalorder %s25, 0
      %p167 = por %p165, %p166
      %s168 = ssub.s32 %s19, %s26
      %p169 = scmp.eq.s32.totalorder %s168, 0
      %s171 = sadd.s32 %s170, 1
      %s172 = scalar_select %p169, %s170, %s171
      %p175 = pneg %p169
      %p176 = scmp.eq.s32.totalorder %s19, 1
      %p177 = por %p175, %p176
      %p178 = scmp.ne.s32.totalorder %s170, %s173
      %p179 = scmp.eq.s32.totalorder %s19, 0
      %p180 = por %p178, %p179
      %p181 = scmp.ne.s32.totalorder %s170, %s173
      %p182 = scmp.eq.s32.totalorder %s24, 1
      %p183 = por %p181, %p182
      %p184 = scmp.ne.s32.totalorder %s173, %s174
      %p185 = scmp.eq.s32.totalorder %s24, 0
      %p186 = por %p184, %p185
      %p187 = scmp.ne.s32.totalorder %s173, %s174
      %p188 = scmp.eq.s32.totalorder %s25, 1
      %p189 = por %p187, %p188
      %p191 = scmp.ne.s32.totalorder %s174, %s190
      %p192 = scmp.eq.s32.totalorder %s25, 0
      %p193 = por %p191, %p192
      %p194 = scmp.le.s32.totalorder 1, %s19
      %p195 = scmp.lt.s32.totalorder %s19, 3
      %p196 = pnand %p194, %p195
      %p197 = pneg %p196
      // Predicated region
      $region9: #{tpu_custom_call.1} parent=5 // pred_check
        _
      $region10: #{tpu_custom_call.1} parent=5 // pred_check_branch
        %199 = sbr.rel (%p196) target = $region12
      $region11: #{tpu_custom_call.1} parent=5 // pred_region
        %s200 = ssub.s32 %s19, 1
        // Predicated region
        $region13: #{tpu_custom_call.1} parent=11 // pred_check
          %p201 = pneg %p66
        $region14: #{tpu_custom_call.1} parent=11 // pred_check_branch
          %203 = sbr.rel (%p201) target = $region16
        $region15: #{tpu_custom_call.1} parent=11 // pred_region
          _
        $region16: #{tpu_custom_call.1} parent=11 // pred_fallthru
          _
        // Predicated region
        $region17: #{tpu_custom_call.1} parent=11 // pred_check
          %p204 = pneg %p87
        $region18: #{tpu_custom_call.1} parent=11 // pred_check_branch
          %206 = sbr.rel (%p204) target = $region20
        $region19: #{tpu_custom_call.1} parent=11 // pred_region
          _
        $region20: #{tpu_custom_call.1} parent=11 // pred_fallthru
          _
        // Predicated region
        $region21: #{tpu_custom_call.1} parent=11 // pred_check
          %p207 = pneg %p108
        $region22: #{tpu_custom_call.1} parent=11 // pred_check_branch
          %209 = sbr.rel (%p207) target = $region24
        $region23: #{tpu_custom_call.1} parent=11 // pred_region
          _
        $region24: #{tpu_custom_call.1} parent=11 // pred_fallthru
          _
      $region12: #{tpu_custom_call.1} parent=5 // pred_fallthru
        _
      %p210 = scmp.lt.s32.totalorder %s19, 2
      // Predicated region
      $region25: #{tpu_custom_call.1} parent=5 // pred_check
        %p211 = pneg %p210
      $region26: #{tpu_custom_call.1} parent=5 // pred_check_branch
        %213 = sbr.rel (%p211) target = $region28
      $region27: #{tpu_custom_call.1} parent=5 // pred_region
        // Predicated region
        $region29: #{tpu_custom_call.1} parent=27 // pred_check
          %p214 = pneg %p39
        $region30: #{tpu_custom_call.1} parent=27 // pred_check_branch
          %216 = sbr.rel (%p214) target = $region32
        $region31: #{tpu_custom_call.1} parent=27 // pred_region
          %s217 = smul.u32 16, %s19
          %p218 = scmp.lt.s32.totalorder %s217, 31
          %s219 = scalar_select %p218, %s217, 31
          %s220 = smul.addr %s219, 8
          %s221 = scalar_lea.vmem %s0, %s220
          %s222 = smul.u32 16, %s19
        $region32: #{tpu_custom_call.1} parent=27 // pred_fallthru
          _
      $region28: #{tpu_custom_call.1} parent=5 // pred_fallthru
        _
      %p223 = scmp.le.s32.totalorder 1, %s19
      %p224 = scmp.lt.s32.totalorder %s19, 3
      %p225 = pnand %p223, %p224
      %p226 = pneg %p225
      // Predicated region
      $region33: #{tpu_custom_call.1} parent=5 // pred_check
        _
      $region34: #{tpu_custom_call.1} parent=5 // pred_check_branch
        %228 = sbr.rel (%p225) target = $region36
      $region35: #{tpu_custom_call.1} parent=5 // pred_region
        %s229 = ssub.s32 %s19, 1
        %s230 = smul.u32 16, %s24
        %p231 = scmp.lt.s32.totalorder %s230, 31
        %s232 = scalar_select %p231, %s230, 31
        %s233 = smul.addr %s232, 8
        %s234 = scalar_lea.vmem %s0, %s233
        %p235 = pneg %p45
        %p236 = pneg %p42
        %p237 = pneg %p66
        %p238 = pneg %p63
        %p239 = pneg %p87
        %p240 = pneg %p84
        %p241 = pneg %p108
        %p242 = pneg %p105
        %p243 = pneg %p134
        %p244 = pneg %p131
        %s245 = sand.u32 %s121, 1
        %s246 = sand.u32 %s121, 1
        %s247 = smul.addr %s246, 384
        %s248 = scalar_lea.vmem [#allocation2], %s247
        %p249 = pneg %p160
        %p250 = pneg %p157
        %s251 = sand.u32 %s147, 1
        %s252 = scalar_lea.sflag [#allocation4], %s251
        %s253 = sand.u32 %s147, 1
        %s254 = smul.addr %s253, 128
        %s255 = scalar_lea.vmem [#allocation3], %s254
        %p256 = pneg %p186
        %p257 = pneg %p183
        %s258 = sand.u32 %s173, 1
        %s259 = scalar_lea.sflag [#allocation6], %s258
        %s260 = sand.u32 %s173, 1
        %s261 = smul.addr %s260, 8
        %s262 = scalar_lea.vmem [#allocation5], %s261
        %s263 = smul.u32 16, %s24
        %p264 = scmp.lt.s32.totalorder %s263, 31
        %s265 = scalar_select %p264, %s263, 31
        %s266 = smul.addr %s265, 8
        %s267 = scalar_lea.vmem %s0, %s266
        %s268 = smul.u32 16, %s24
        %s269 = smul.u32 16, %s24
        %s270 = smul.u32 16, %s24
        %v271 = vld [vmem:[%s267] sm:$0xff]
        %v272 = vld [vmem:[%s267 + $0x8] sm:$0xff]
        %v273 = vld [vmem:[%s267 + $0x10] sm:$0xff]
        %v274 = vld [vmem:[%s267 + $0x18] sm:$0xff]
        %v275 = vld [vmem:[%s267 + $0x20] sm:$0xff]
        %v276 = vld [vmem:[%s267 + $0x28] sm:$0xff]
        %v277 = vld [vmem:[%s267 + $0x30] sm:$0xff]
        %v278 = vld [vmem:[%s267 + $0x38] sm:$0xff]
        %v279 = vld [vmem:[%s267 + $0x40] sm:$0xff]
        %v280 = vld [vmem:[%s267 + $0x48] sm:$0xff]
        %v281 = vld [vmem:[%s267 + $0x50] sm:$0xff]
        %v282 = vld [vmem:[%s267 + $0x58] sm:$0xff]
        %v283 = vld [vmem:[%s267 + $0x60] sm:$0xff]
        %v284 = vld [vmem:[%s267 + $0x68] sm:$0xff]
        %v285 = vld [vmem:[%s267 + $0x70] sm:$0xff]
        %v286 = vld [vmem:[%s267 + $0x78] sm:$0xff]
        %v287 = vld [vmem:[%s1] sm:$0xff]
        %v288 = vld [vmem:[%s1 + $0x8] sm:$0xff]
        %v289 = vld [vmem:[%s1 + $0x10] sm:$0xff]
        %v290 = vld [vmem:[%s1 + $0x18] sm:$0xff]
        %vm291 = vcmask 261120
        %v293 = vsel %vm291, %v271, 0
        %v296 = vsel %vm291, %v272, 0
        %v299 = vsel %vm291, %v273, 0
        %v302 = vsel %vm291, %v274, 0
        %v305 = vsel %vm291, %v275, 0
        %v308 = vsel %vm291, %v276, 0
        %v311 = vsel %vm291, %v277, 0
        %v314 = vsel %vm291, %v278, 0
        %v317 = vsel %vm291, %v279, 0
        %v320 = vsel %vm291, %v280, 0
        %v323 = vsel %vm291, %v281, 0
        %v326 = vsel %vm291, %v282, 0
        %v329 = vsel %vm291, %v283, 0
        %v332 = vsel %vm291, %v284, 0
        %v335 = vsel %vm291, %v285, 0
        %v338 = vsel %vm291, %v286, 0
        %340 = vmatpush.msra.mxu0 0.0
        %341 = vmatpush.msra.mxu0 0.0
        %342 = vmatpush.msra.mxu0 0.0
        %343 = vmatpush.msra.mxu0 0.0
        %344 = vmatpush.msra.mxu0 0.0
        %345 = vmatpush.msra.mxu0 0.0
        %346 = vmatpush.msra.mxu0 0.0
        %347 = vmatpush.msra.mxu0 0.0
        %348 = vmatpush.msra.mxu0 0.0
        %349 = vmatpush.msra.mxu0 0.0
        %350 = vmatpush.msra.mxu0 0.0
        %351 = vmatpush.msra.mxu0 0.0
        %352 = vmatpush.msra.mxu0 %v290
        %353 = vmatpush.msra.mxu0 %v289
        %354 = vmatpush.msra.mxu0 %v288
        %355 = vmatpush.msra.mxu0 %v287
        %356 = vmatmul.f32.gmra.mxu0 %v293
        %v357 = vpop.f32.mrf.mxu0
        %v358 = vadd.f32 0.0, %v357
        %359 = vmatmul.f32.gmra.mxu0 %v296
        %v360 = vpop.f32.mrf.mxu0
        %v361 = vadd.f32 0.0, %v360
        %362 = vmatmul.f32.gmra.mxu0 %v299
        %v363 = vpop.f32.mrf.mxu0
        %v364 = vadd.f32 0.0, %v363
        %365 = vmatmul.f32.gmra.mxu0 %v302
        %v366 = vpop.f32.mrf.mxu0
        %v367 = vadd.f32 0.0, %v366
        %368 = vmatmul.f32.gmra.mxu0 %v305
        %v369 = vpop.f32.mrf.mxu0
        %v370 = vadd.f32 0.0, %v369
        %371 = vmatmul.f32.gmra.mxu0 %v308
        %v372 = vpop.f32.mrf.mxu0
        %v373 = vadd.f32 0.0, %v372
        %374 = vmatmul.f32.gmra.mxu0 %v311
        %v375 = vpop.f32.mrf.mxu0
        %v376 = vadd.f32 0.0, %v375
        %377 = vmatmul.f32.gmra.mxu0 %v314
        %v378 = vpop.f32.mrf.mxu0
        %v379 = vadd.f32 0.0, %v378
        %380 = vmatmul.f32.gmra.mxu0 %v317
        %v381 = vpop.f32.mrf.mxu0
        %v382 = vadd.f32 0.0, %v381
        %383 = vmatmul.f32.gmra.mxu0 %v320
        %v384 = vpop.f32.mrf.mxu0
        %v385 = vadd.f32 0.0, %v384
        %386 = vmatmul.f32.gmra.mxu0 %v323
        %v387 = vpop.f32.mrf.mxu0
        %v388 = vadd.f32 0.0, %v387
        %389 = vmatmul.f32.gmra.mxu0 %v326
        %v390 = vpop.f32.mrf.mxu0
        %v391 = vadd.f32 0.0, %v390
        %392 = vmatmul.f32.gmra.mxu0 %v329
        %v393 = vpop.f32.mrf.mxu0
        %v394 = vadd.f32 0.0, %v393
        %395 = vmatmul.f32.gmra.mxu0 %v332
        %v396 = vpop.f32.mrf.mxu0
        %v397 = vadd.f32 0.0, %v396
        %398 = vmatmul.f32.gmra.mxu0 %v335
        %v399 = vpop.f32.mrf.mxu0
        %v400 = vadd.f32 0.0, %v399
        %401 = vmatmul.f32.gmra.mxu0 %v338
        %v402 = vpop.f32.mrf.mxu0
        %v403 = vadd.f32 0.0, %v402
        %404 = vdwg.mxu0
        %v405 = vld [vmem:[%s2] sm:$0xff]
        %v406 = vld [vmem:[%s2 + $0x8] sm:$0xff]
        %v407 = vld [vmem:[%s2 + $0x10] sm:$0xff]
        %v408 = vld [vmem:[%s2 + $0x18] sm:$0xff]
        %v409 = vld [vmem:[%s2 + $0x20] sm:$0xff]
        %v410 = vld [vmem:[%s2 + $0x28] sm:$0xff]
        %v411 = vld [vmem:[%s2 + $0x30] sm:$0xff]
        %v412 = vld [vmem:[%s2 + $0x38] sm:$0xff]
        %v413 = vld [vmem:[%s2 + $0x40] sm:$0xff]
        %v414 = vld [vmem:[%s2 + $0x48] sm:$0xff]
        %v415 = vld [vmem:[%s2 + $0x50] sm:$0xff]
        %v416 = vld [vmem:[%s2 + $0x58] sm:$0xff]
        %vm417 = vcmask 785408
        %v419 = vsel %vm417, %v358, 0
        %v422 = vsel %vm417, %v361, 0
        %v425 = vsel %vm417, %v364, 0
        %v428 = vsel %vm417, %v367, 0
        %v431 = vsel %vm417, %v370, 0
        %v434 = vsel %vm417, %v373, 0
        %v437 = vsel %vm417, %v376, 0
        %v440 = vsel %vm417, %v379, 0
        %v443 = vsel %vm417, %v382, 0
        %v446 = vsel %vm417, %v385, 0
        %v449 = vsel %vm417, %v388, 0
        %v452 = vsel %vm417, %v391, 0
        %v455 = vsel %vm417, %v394, 0
        %v458 = vsel %vm417, %v397, 0
        %v461 = vsel %vm417, %v400, 0
        %v464 = vsel %vm417, %v403, 0
        %466 = vmatpush.msra.mxu0 0.0
        %467 = vmatpush.msra.mxu0 0.0
        %468 = vmatpush.msra.mxu0 0.0
        %469 = vmatpush.msra.mxu0 0.0
        %470 = vmatpush.msra.mxu0 %v416
        %471 = vmatpush.msra.mxu0 %v415
        %472 = vmatpush.msra.mxu0 %v414
        %473 = vmatpush.msra.mxu0 %v413
        %474 = vmatpush.msra.mxu0 %v412
        %475 = vmatpush.msra.mxu0 %v411
        %476 = vmatpush.msra.mxu0 %v410
        %477 = vmatpush.msra.mxu0 %v409
        %478 = vmatpush.msra.mxu0 %v408
        %479 = vmatpush.msra.mxu0 %v407
        %480 = vmatpush.msra.mxu0 %v406
        %481 = vmatpush.msra.mxu0 %v405
        %482 = vmatmul.f32.gmra.mxu0 %v419
        %v483 = vpop.f32.mrf.mxu0
        %v484 = vadd.f32 0.0, %v483
        %485 = vmatmul.f32.gmra.mxu0 %v422
        %v486 = vpop.f32.mrf.mxu0
        %v487 = vadd.f32 0.0, %v486
        %488 = vmatmul.f32.gmra.mxu0 %v425
        %v489 = vpop.f32.mrf.mxu0
        %v490 = vadd.f32 0.0, %v489
        %491 = vmatmul.f32.gmra.mxu0 %v428
        %v492 = vpop.f32.mrf.mxu0
        %v493 = vadd.f32 0.0, %v492
        %494 = vmatmul.f32.gmra.mxu0 %v431
        %v495 = vpop.f32.mrf.mxu0
        %v496 = vadd.f32 0.0, %v495
        %497 = vmatmul.f32.gmra.mxu0 %v434
        %v498 = vpop.f32.mrf.mxu0
        %v499 = vadd.f32 0.0, %v498
        %500 = vmatmul.f32.gmra.mxu0 %v437
        %v501 = vpop.f32.mrf.mxu0
        %v502 = vadd.f32 0.0, %v501
        %503 = vmatmul.f32.gmra.mxu0 %v440
        %v504 = vpop.f32.mrf.mxu0
        %v505 = vadd.f32 0.0, %v504
        %506 = vmatmul.f32.gmra.mxu0 %v443
        %v507 = vpop.f32.mrf.mxu0
        %v508 = vadd.f32 0.0, %v507
        %509 = vmatmul.f32.gmra.mxu0 %v446
        %v510 = vpop.f32.mrf.mxu0
        %v511 = vadd.f32 0.0, %v510
        %512 = vmatmul.f32.gmra.mxu0 %v449
        %v513 = vpop.f32.mrf.mxu0
        %v514 = vadd.f32 0.0, %v513
        %515 = vmatmul.f32.gmra.mxu0 %v452
        %v516 = vpop.f32.mrf.mxu0
        %v517 = vadd.f32 0.0, %v516
        %518 = vmatmul.f32.gmra.mxu0 %v455
        %v519 = vpop.f32.mrf.mxu0
        %v520 = vadd.f32 0.0, %v519
        %521 = vmatmul.f32.gmra.mxu0 %v458
        %v522 = vpop.f32.mrf.mxu0
        %v523 = vadd.f32 0.0, %v522
        %524 = vmatmul.f32.gmra.mxu0 %v461
        %v525 = vpop.f32.mrf.mxu0
        %v526 = vadd.f32 0.0, %v525
        %527 = vmatmul.f32.gmra.mxu0 %v464
        %v528 = vpop.f32.mrf.mxu0
        %v529 = vadd.f32 0.0, %v528
        %530 = vdwg.mxu0
        %531 = vst [vmem:[%s255] sm:$0xff] %v484
        %532 = vst [vmem:[%s255 + $0x8] sm:$0xff] %v487
        %533 = vst [vmem:[%s255 + $0x10] sm:$0xff] %v490
        %534 = vst [vmem:[%s255 + $0x18] sm:$0xff] %v493
        %535 = vst [vmem:[%s255 + $0x20] sm:$0xff] %v496
        %536 = vst [vmem:[%s255 + $0x28] sm:$0xff] %v499
        %537 = vst [vmem:[%s255 + $0x30] sm:$0xff] %v502
        %538 = vst [vmem:[%s255 + $0x38] sm:$0xff] %v505
        %539 = vst [vmem:[%s255 + $0x40] sm:$0xff] %v508
        %540 = vst [vmem:[%s255 + $0x48] sm:$0xff] %v511
        %541 = vst [vmem:[%s255 + $0x50] sm:$0xff] %v514
        %542 = vst [vmem:[%s255 + $0x58] sm:$0xff] %v517
        %543 = vst [vmem:[%s255 + $0x60] sm:$0xff] %v520
        %544 = vst [vmem:[%s255 + $0x68] sm:$0xff] %v523
        %545 = vst [vmem:[%s255 + $0x70] sm:$0xff] %v526
        %546 = vst [vmem:[%s255 + $0x78] sm:$0xff] %v529
        %v547 = vld [vmem:[%s3] sm:$0xff]
        %v549 = vsel %vm417, %v547, 0
        %551 = vmatpush.xpose.msra.mxu0 %v464
        %552 = vmatpush.xpose.msra.mxu0 %v461
        %553 = vmatpush.xpose.msra.mxu0 %v458
        %554 = vmatpush.xpose.msra.mxu0 %v455
        %555 = vmatpush.xpose.msra.mxu0 %v452
        %556 = vmatpush.xpose.msra.mxu0 %v449
        %557 = vmatpush.xpose.msra.mxu0 %v446
        %558 = vmatpush.xpose.msra.mxu0 %v443
        %559 = vmatpush.xpose.msra.mxu0 %v440
        %560 = vmatpush.xpose.msra.mxu0 %v437
        %561 = vmatpush.xpose.msra.mxu0 %v434
        %562 = vmatpush.xpose.msra.mxu0 %v431
        %563 = vmatpush.xpose.msra.mxu0 %v428
        %564 = vmatpush.xpose.msra.mxu0 %v425
        %565 = vmatpush.xpose.msra.mxu0 %v422
        %566 = vmatpush.xpose.msra.mxu0 %v419
        %567 = vmatmul.f32.gmra.mxu0 %v549
        %v568 = vpop.f32.mrf.mxu0
        %v569 = vadd.f32 0.0, %v568
        %570 = vdwg.mxu0
        %571 = vst [vmem:[%s262] sm:$0xff] %v569
        %572 = vst.msk [vmem:[%s248] sm:$0xff] %vm291, %v358
        %573 = vst.msk [vmem:[%s248 + $0x8] sm:$0xff] %vm291, %v361
        %574 = vst.msk [vmem:[%s248 + $0x10] sm:$0xff] %vm291, %v364
        %575 = vst.msk [vmem:[%s248 + $0x18] sm:$0xff] %vm291, %v367
        %576 = vst.msk [vmem:[%s248 + $0x20] sm:$0xff] %vm291, %v370
        %577 = vst.msk [vmem:[%s248 + $0x28] sm:$0xff] %vm291, %v373
        %578 = vst.msk [vmem:[%s248 + $0x30] sm:$0xff] %vm291, %v376
        %579 = vst.msk [vmem:[%s248 + $0x38] sm:$0xff] %vm291, %v379
        %580 = vst.msk [vmem:[%s248 + $0x40] sm:$0xff] %vm291, %v382
        %581 = vst.msk [vmem:[%s248 + $0x48] sm:$0xff] %vm291, %v385
        %582 = vst.msk [vmem:[%s248 + $0x50] sm:$0xff] %vm291, %v388
        %583 = vst.msk [vmem:[%s248 + $0x58] sm:$0xff] %vm291, %v391
        %584 = vst.msk [vmem:[%s248 + $0x60] sm:$0xff] %vm291, %v394
        %585 = vst.msk [vmem:[%s248 + $0x68] sm:$0xff] %vm291, %v397
        %586 = vst.msk [vmem:[%s248 + $0x70] sm:$0xff] %vm291, %v400
        %587 = vst.msk [vmem:[%s248 + $0x78] sm:$0xff] %vm291, %v403
        %588 = vrot.lane.b32.xlu0 %v358, 96
        %v589 = vpop.permute.xlu0 %588
        %590 = vrot.lane.b32.xlu0 %v361, 96
        %v591 = vpop.permute.xlu0 %590
        %592 = vrot.lane.b32.xlu0 %v364, 96
        %v593 = vpop.permute.xlu0 %592
        %594 = vrot.lane.b32.xlu0 %v367, 96
        %v595 = vpop.permute.xlu0 %594
        %596 = vrot.lane.b32.xlu0 %v370, 96
        %v597 = vpop.permute.xlu0 %596
        %598 = vrot.lane.b32.xlu0 %v373, 96
        %v599 = vpop.permute.xlu0 %598
        %600 = vrot.lane.b32.xlu0 %v376, 96
        %v601 = vpop.permute.xlu0 %600
        %602 = vrot.lane.b32.xlu0 %v379, 96
        %v603 = vpop.permute.xlu0 %602
        %604 = vrot.lane.b32.xlu0 %v382, 96
        %v605 = vpop.permute.xlu0 %604
        %606 = vrot.lane.b32.xlu0 %v385, 96
        %v607 = vpop.permute.xlu0 %606
        %608 = vrot.lane.b32.xlu0 %v388, 96
        %v609 = vpop.permute.xlu0 %608
        %610 = vrot.lane.b32.xlu0 %v391, 96
        %v611 = vpop.permute.xlu0 %610
        %612 = vrot.lane.b32.xlu0 %v394, 96
        %v613 = vpop.permute.xlu0 %612
        %614 = vrot.lane.b32.xlu0 %v397, 96
        %v615 = vpop.permute.xlu0 %614
        %616 = vrot.lane.b32.xlu0 %v400, 96
        %v617 = vpop.permute.xlu0 %616
        %618 = vrot.lane.b32.xlu0 %v403, 96
        %v619 = vpop.permute.xlu0 %618
        %s636 = scalar_lea.vmem %s248, 128 [#allocation2]
        %637 = vst.msk [vmem:[%s636] sm:$0xff] %vm291, %v589
        %638 = vst.msk [vmem:[%s636 + $0x8] sm:$0xff] %vm291, %v591
        %639 = vst.msk [vmem:[%s636 + $0x10] sm:$0xff] %vm291, %v593
        %640 = vst.msk [vmem:[%s636 + $0x18] sm:$0xff] %vm291, %v595
        %641 = vst.msk [vmem:[%s636 + $0x20] sm:$0xff] %vm291, %v597
        %642 = vst.msk [vmem:[%s636 + $0x28] sm:$0xff] %vm291, %v599
        %643 = vst.msk [vmem:[%s636 + $0x30] sm:$0xff] %vm291, %v601
        %644 = vst.msk [vmem:[%s636 + $0x38] sm:$0xff] %vm291, %v603
        %645 = vst.msk [vmem:[%s636 + $0x40] sm:$0xff] %vm291, %v605
        %646 = vst.msk [vmem:[%s636 + $0x48] sm:$0xff] %vm291, %v607
        %647 = vst.msk [vmem:[%s636 + $0x50] sm:$0xff] %vm291, %v609
        %648 = vst.msk [vmem:[%s636 + $0x58] sm:$0xff] %vm291, %v611
        %649 = vst.msk [vmem:[%s636 + $0x60] sm:$0xff] %vm291, %v613
        %650 = vst.msk [vmem:[%s636 + $0x68] sm:$0xff] %vm291, %v615
        %651 = vst.msk [vmem:[%s636 + $0x70] sm:$0xff] %vm291, %v617
        %652 = vst.msk [vmem:[%s636 + $0x78] sm:$0xff] %vm291, %v619
        %653 = vrot.lane.b32.xlu0 %v358, 64
        %v654 = vpop.permute.xlu0 %653
        %655 = vrot.lane.b32.xlu0 %v361, 64
        %v656 = vpop.permute.xlu0 %655
        %657 = vrot.lane.b32.xlu0 %v364, 64
        %v658 = vpop.permute.xlu0 %657
        %659 = vrot.lane.b32.xlu0 %v367, 64
        %v660 = vpop.permute.xlu0 %659
        %661 = vrot.lane.b32.xlu0 %v370, 64
        %v662 = vpop.permute.xlu0 %661
        %663 = vrot.lane.b32.xlu0 %v373, 64
        %v664 = vpop.permute.xlu0 %663
        %665 = vrot.lane.b32.xlu0 %v376, 64
        %v666 = vpop.permute.xlu0 %665
        %667 = vrot.lane.b32.xlu0 %v379, 64
        %v668 = vpop.permute.xlu0 %667
        %669 = vrot.lane.b32.xlu0 %v382, 64
        %v670 = vpop.permute.xlu0 %669
        %671 = vrot.lane.b32.xlu0 %v385, 64
        %v672 = vpop.permute.xlu0 %671
        %673 = vrot.lane.b32.xlu0 %v388, 64
        %v674 = vpop.permute.xlu0 %673
        %675 = vrot.lane.b32.xlu0 %v391, 64
        %v676 = vpop.permute.xlu0 %675
        %677 = vrot.lane.b32.xlu0 %v394, 64
        %v678 = vpop.permute.xlu0 %677
        %679 = vrot.lane.b32.xlu0 %v397, 64
        %v680 = vpop.permute.xlu0 %679
        %681 = vrot.lane.b32.xlu0 %v400, 64
        %v682 = vpop.permute.xlu0 %681
        %683 = vrot.lane.b32.xlu0 %v403, 64
        %v684 = vpop.permute.xlu0 %683
        %s701 = scalar_lea.vmem %s248, 256 [#allocation2]
        %702 = vst.msk [vmem:[%s701] sm:$0xff] %vm291, %v654
        %703 = vst.msk [vmem:[%s701 + $0x8] sm:$0xff] %vm291, %v656
        %704 = vst.msk [vmem:[%s701 + $0x10] sm:$0xff] %vm291, %v658
        %705 = vst.msk [vmem:[%s701 + $0x18] sm:$0xff] %vm291, %v660
        %706 = vst.msk [vmem:[%s701 + $0x20] sm:$0xff] %vm291, %v662
        %707 = vst.msk [vmem:[%s701 + $0x28] sm:$0xff] %vm291, %v664
        %708 = vst.msk [vmem:[%s701 + $0x30] sm:$0xff] %vm291, %v666
        %709 = vst.msk [vmem:[%s701 + $0x38] sm:$0xff] %vm291, %v668
        %710 = vst.msk [vmem:[%s701 + $0x40] sm:$0xff] %vm291, %v670
        %711 = vst.msk [vmem:[%s701 + $0x48] sm:$0xff] %vm291, %v672
        %712 = vst.msk [vmem:[%s701 + $0x50] sm:$0xff] %vm291, %v674
        %713 = vst.msk [vmem:[%s701 + $0x58] sm:$0xff] %vm291, %v676
        %714 = vst.msk [vmem:[%s701 + $0x60] sm:$0xff] %vm291, %v678
        %715 = vst.msk [vmem:[%s701 + $0x68] sm:$0xff] %vm291, %v680
        %716 = vst.msk [vmem:[%s701 + $0x70] sm:$0xff] %vm291, %v682
        %717 = vst.msk [vmem:[%s701 + $0x78] sm:$0xff] %vm291, %v684
        %s718 = sand.u32 %s121, 1
        %s719 = sand.u32 %s121, 1
        %s720 = smul.addr %s719, 384
        %s721 = scalar_lea.vmem [#allocation2], %s720
        %s722 = sand.u32 %s147, 1
        %s723 = scalar_lea.sflag [#allocation4], %s722
        %s724 = sand.u32 %s147, 1
        %s725 = smul.addr %s724, 128
        %s726 = scalar_lea.vmem [#allocation3], %s725
        %s727 = sand.u32 %s173, 1
        %s728 = scalar_lea.sflag [#allocation6], %s727
        %s729 = sand.u32 %s173, 1
        %s730 = smul.addr %s729, 8
        %s731 = scalar_lea.vmem [#allocation5], %s730
        // Predicated region
        $region37: #{tpu_custom_call.1} parent=35 // pred_check
          %p732 = pneg %p131
        $region38: #{tpu_custom_call.1} parent=35 // pred_check_branch
          %734 = sbr.rel (%p732) target = $region40
        $region39: #{tpu_custom_call.1} parent=35 // pred_region
          %s735 = smul.u32 16, %s24
          %s736 = smul.addr %s735, 8
          %s737 = scalar_lea.vmem %s4, %s736
          // Predicated region
          $region41: #{tpu_custom_call.1} parent=39 // pred_check
            _
          $region42: #{tpu_custom_call.1} parent=39 // pred_check_branch
            %739 = sbr.rel (0) target = $region44
          $region43: #{tpu_custom_call.1} parent=39 // pred_region
            // Predicated region
            $region45: #{tpu_custom_call.1} parent=43 // pred_check
              _
            $region46: #{tpu_custom_call.1} parent=43 // pred_check_branch
              %741 = sbr.rel (0) target = $region48
            $region47: #{tpu_custom_call.1} parent=43 // pred_region
              // Predicated region
              $region60: #{tpu_custom_call.1} parent=47 // pred_check
                _
              $region61: #{tpu_custom_call.1} parent=47 // pred_check_branch
                %851 = sbr.rel (0) target = $region63
              $region62: #{tpu_custom_call.1} parent=47 // pred_region
                loop: start=0, step=1, limit=1
                $region64: #{tpu_custom_call.1} parent=62 // loop_pre_header
                  _
                $region65: #{tpu_custom_call.1} parent=62 // loop_header
                  %s853 = sphi 0, %s857
                  %p854 = scmp.ge.s32.totalorder %s853, 1
                  %s858 = sphi %s721, %s721
                  %s859 = sphi %s737, %s737
                $region66: #{tpu_custom_call.1} parent=62 // loop_header_branch
                  %856 = sbr.rel (%p854) target = $region70
                $region67: #{tpu_custom_call.1} parent=62 // loop_body
                  %v860 = vld [vmem:[%s858] sm:$0xff]
                  %861 = vst [vmem:[%s859] sm:$0xff] %v860
                  %v862 = vld [vmem:[%s858 + $0x8] sm:$0xff]
                  %863 = vst [vmem:[%s859 + $0x8] sm:$0xff] %v862
                  %v864 = vld [vmem:[%s858 + $0x10] sm:$0xff]
                  %865 = vst [vmem:[%s859 + $0x10] sm:$0xff] %v864
                  %v866 = vld [vmem:[%s858 + $0x18] sm:$0xff]
                  %867 = vst [vmem:[%s859 + $0x18] sm:$0xff] %v866
                  %v868 = vld [vmem:[%s858 + $0x20] sm:$0xff]
                  %869 = vst [vmem:[%s859 + $0x20] sm:$0xff] %v868
                  %v870 = vld [vmem:[%s858 + $0x28] sm:$0xff]
                  %871 = vst [vmem:[%s859 + $0x28] sm:$0xff] %v870
                  %v872 = vld [vmem:[%s858 + $0x30] sm:$0xff]
                  %873 = vst [vmem:[%s859 + $0x30] sm:$0xff] %v872
                  %v874 = vld [vmem:[%s858 + $0x38] sm:$0xff]
                  %875 = vst [vmem:[%s859 + $0x38] sm:$0xff] %v874
                  %v876 = vld [vmem:[%s858 + $0x40] sm:$0xff]
                  %877 = vst [vmem:[%s859 + $0x40] sm:$0xff] %v876
                  %v878 = vld [vmem:[%s858 + $0x48] sm:$0xff]
                  %879 = vst [vmem:[%s859 + $0x48] sm:$0xff] %v878
                  %v880 = vld [vmem:[%s858 + $0x50] sm:$0xff]
                  %881 = vst [vmem:[%s859 + $0x50] sm:$0xff] %v880
                  %v882 = vld [vmem:[%s858 + $0x58] sm:$0xff]
                  %883 = vst [vmem:[%s859 + $0x58] sm:$0xff] %v882
                  %v884 = vld [vmem:[%s858 + $0x60] sm:$0xff]
                  %885 = vst [vmem:[%s859 + $0x60] sm:$0xff] %v884
                  %v886 = vld [vmem:[%s858 + $0x68] sm:$0xff]
                  %887 = vst [vmem:[%s859 + $0x68] sm:$0xff] %v886
                  %v888 = vld [vmem:[%s858 + $0x70] sm:$0xff]
                  %889 = vst [vmem:[%s859 + $0x70] sm:$0xff] %v888
                  %v890 = vld [vmem:[%s858 + $0x78] sm:$0xff]
                  %891 = vst [vmem:[%s859 + $0x78] sm:$0xff] %v890
                  %v892 = vld [vmem:[%s858 + $0x80] sm:$0xff]
                  %893 = vst [vmem:[%s859 + $0x100] sm:$0xff] %v892
                  %v894 = vld [vmem:[%s858 + $0x88] sm:$0xff]
                  %895 = vst [vmem:[%s859 + $0x108] sm:$0xff] %v894
                  %v896 = vld [vmem:[%s858 + $0x90] sm:$0xff]
                  %897 = vst [vmem:[%s859 + $0x110] sm:$0xff] %v896
                  %v898 = vld [vmem:[%s858 + $0x98] sm:$0xff]
                  %899 = vst [vmem:[%s859 + $0x118] sm:$0xff] %v898
                  %v900 = vld [vmem:[%s858 + $0xa0] sm:$0xff]
                  %901 = vst [vmem:[%s859 + $0x120] sm:$0xff] %v900
                  %v902 = vld [vmem:[%s858 + $0xa8] sm:$0xff]
                  %903 = vst [vmem:[%s859 + $0x128] sm:$0xff] %v902
                  %v904 = vld [vmem:[%s858 + $0xb0] sm:$0xff]
                  %905 = vst [vmem:[%s859 + $0x130] sm:$0xff] %v904
                  %v906 = vld [vmem:[%s858 + $0xb8] sm:$0xff]
                  %907 = vst [vmem:[%s859 + $0x138] sm:$0xff] %v906
                  %v908 = vld [vmem:[%s858 + $0xc0] sm:$0xff]
                  %909 = vst [vmem:[%s859 + $0x140] sm:$0xff] %v908
                  %v910 = vld [vmem:[%s858 + $0xc8] sm:$0xff]
                  %911 = vst [vmem:[%s859 + $0x148] sm:$0xff] %v910
                  %v912 = vld [vmem:[%s858 + $0xd0] sm:$0xff]
                  %913 = vst [vmem:[%s859 + $0x150] sm:$0xff] %v912
                  %v914 = vld [vmem:[%s858 + $0xd8] sm:$0xff]
                  %915 = vst [vmem:[%s859 + $0x158] sm:$0xff] %v914
                  %v916 = vld [vmem:[%s858 + $0xe0] sm:$0xff]
                  %917 = vst [vmem:[%s859 + $0x160] sm:$0xff] %v916
                  %v918 = vld [vmem:[%s858 + $0xe8] sm:$0xff]
                  %919 = vst [vmem:[%s859 + $0x168] sm:$0xff] %v918
                  %v920 = vld [vmem:[%s858 + $0xf0] sm:$0xff]
                  %921 = vst [vmem:[%s859 + $0x170] sm:$0xff] %v920
                  %v922 = vld [vmem:[%s858 + $0xf8] sm:$0xff]
                  %923 = vst [vmem:[%s859 + $0x178] sm:$0xff] %v922
                  %v924 = vld [vmem:[%s858 + $0x100] sm:$0xff]
                  %925 = vst [vmem:[%s859 + $0x200] sm:$0xff] %v924
                  %v926 = vld [vmem:[%s858 + $0x108] sm:$0xff]
                  %927 = vst [vmem:[%s859 + $0x208] sm:$0xff] %v926
                  %v928 = vld [vmem:[%s858 + $0x110] sm:$0xff]
                  %929 = vst [vmem:[%s859 + $0x210] sm:$0xff] %v928
                  %v930 = vld [vmem:[%s858 + $0x118] sm:$0xff]
                  %931 = vst [vmem:[%s859 + $0x218] sm:$0xff] %v930
                  %v932 = vld [vmem:[%s858 + $0x120] sm:$0xff]
                  %933 = vst [vmem:[%s859 + $0x220] sm:$0xff] %v932
                  %v934 = vld [vmem:[%s858 + $0x128] sm:$0xff]
                  %935 = vst [vmem:[%s859 + $0x228] sm:$0xff] %v934
                  %v936 = vld [vmem:[%s858 + $0x130] sm:$0xff]
                  %937 = vst [vmem:[%s859 + $0x230] sm:$0xff] %v936
                  %v938 = vld [vmem:[%s858 + $0x138] sm:$0xff]
                  %939 = vst [vmem:[%s859 + $0x238] sm:$0xff] %v938
                  %v940 = vld [vmem:[%s858 + $0x140] sm:$0xff]
                  %941 = vst [vmem:[%s859 + $0x240] sm:$0xff] %v940
                  %v942 = vld [vmem:[%s858 + $0x148] sm:$0xff]
                  %943 = vst [vmem:[%s859 + $0x248] sm:$0xff] %v942
                  %v944 = vld [vmem:[%s858 + $0x150] sm:$0xff]
                  %945 = vst [vmem:[%s859 + $0x250] sm:$0xff] %v944
                  %v946 = vld [vmem:[%s858 + $0x158] sm:$0xff]
                  %947 = vst [vmem:[%s859 + $0x258] sm:$0xff] %v946
                  %v948 = vld [vmem:[%s858 + $0x160] sm:$0xff]
                  %949 = vst [vmem:[%s859 + $0x260] sm:$0xff] %v948
                  %v950 = vld [vmem:[%s858 + $0x168] sm:$0xff]
                  %951 = vst [vmem:[%s859 + $0x268] sm:$0xff] %v950
                  %v952 = vld [vmem:[%s858 + $0x170] sm:$0xff]
                  %953 = vst [vmem:[%s859 + $0x270] sm:$0xff] %v952
                  %v954 = vld [vmem:[%s858 + $0x178] sm:$0xff]
                  %955 = vst [vmem:[%s859 + $0x278] sm:$0xff] %v954
                $region68: #{tpu_custom_call.1} parent=62 // loop_footer
                  %s857 = sadd.s32 1, %s853
                $region69: #{tpu_custom_call.1} parent=62 // loop_footer_branch
                  %852 = sbr.rel target = $region65
                $region70: #{tpu_custom_call.1} parent=62 // loop_exit
                  _
              $region63: #{tpu_custom_call.1} parent=47 // pred_fallthru
                _
              // Predicated region
              $region71: #{tpu_custom_call.1} parent=47 // pred_check
                _
              $region72: #{tpu_custom_call.1} parent=47 // pred_check_branch
                %957 = sbr.rel target = $region74
              $region73: #{tpu_custom_call.1} parent=47 // pred_region
                _
              $region74: #{tpu_custom_call.1} parent=47 // pred_fallthru
                _
            $region48: #{tpu_custom_call.1} parent=43 // pred_fallthru
              _
            // Predicated region
            $region49: #{tpu_custom_call.1} parent=43 // pred_check
              _
            $region50: #{tpu_custom_call.1} parent=43 // pred_check_branch
              %743 = sbr.rel target = $region52
            $region51: #{tpu_custom_call.1} parent=43 // pred_region
              %s745 = ssub.s32 256, 1
              loop: start=0, step=1, limit=1
              $region53: #{tpu_custom_call.1} parent=51 // loop_pre_header
                _
              $region54: #{tpu_custom_call.1} parent=51 // loop_header
                %s747 = sphi 0, %s751
                %p748 = scmp.ge.s32.totalorder %s747, 1
                %s752 = sphi %s721, %s721
                %s753 = sphi %s737, %s737
              $region55: #{tpu_custom_call.1} parent=51 // loop_header_branch
                %750 = sbr.rel (%p748) target = $region59
              $region56: #{tpu_custom_call.1} parent=51 // loop_body
                %v754 = vld [vmem:[%s752] sm:%s745]
                %755 = vst [vmem:[%s753] sm:%s745] %v754
                %v756 = vld [vmem:[%s752 + $0x8] sm:%s745]
                %757 = vst [vmem:[%s753 + $0x8] sm:%s745] %v756
                %v758 = vld [vmem:[%s752 + $0x10] sm:%s745]
                %759 = vst [vmem:[%s753 + $0x10] sm:%s745] %v758
                %v760 = vld [vmem:[%s752 + $0x18] sm:%s745]
                %761 = vst [vmem:[%s753 + $0x18] sm:%s745] %v760
                %v762 = vld [vmem:[%s752 + $0x20] sm:%s745]
                %763 = vst [vmem:[%s753 + $0x20] sm:%s745] %v762
                %v764 = vld [vmem:[%s752 + $0x28] sm:%s745]
                %765 = vst [vmem:[%s753 + $0x28] sm:%s745] %v764
                %v766 = vld [vmem:[%s752 + $0x30] sm:%s745]
                %767 = vst [vmem:[%s753 + $0x30] sm:%s745] %v766
                %v768 = vld [vmem:[%s752 + $0x38] sm:%s745]
                %769 = vst [vmem:[%s753 + $0x38] sm:%s745] %v768
                %v770 = vld [vmem:[%s752 + $0x40] sm:%s745]
                %771 = vst [vmem:[%s753 + $0x40] sm:%s745] %v770
                %v772 = vld [vmem:[%s752 + $0x48] sm:%s745]
                %773 = vst [vmem:[%s753 + $0x48] sm:%s745] %v772
                %v774 = vld [vmem:[%s752 + $0x50] sm:%s745]
                %775 = vst [vmem:[%s753 + $0x50] sm:%s745] %v774
                %v776 = vld [vmem:[%s752 + $0x58] sm:%s745]
                %777 = vst [vmem:[%s753 + $0x58] sm:%s745] %v776
                %v778 = vld [vmem:[%s752 + $0x60] sm:%s745]
                %779 = vst [vmem:[%s753 + $0x60] sm:%s745] %v778
                %v780 = vld [vmem:[%s752 + $0x68] sm:%s745]
                %781 = vst [vmem:[%s753 + $0x68] sm:%s745] %v780
                %v782 = vld [vmem:[%s752 + $0x70] sm:%s745]
                %783 = vst [vmem:[%s753 + $0x70] sm:%s745] %v782
                %v784 = vld [vmem:[%s752 + $0x78] sm:%s745]
                %785 = vst [vmem:[%s753 + $0x78] sm:%s745] %v784
                %v786 = vld [vmem:[%s752 + $0x80] sm:%s745]
                %787 = vst [vmem:[%s753 + $0x100] sm:%s745] %v786
                %v788 = vld [vmem:[%s752 + $0x88] sm:%s745]
                %789 = vst [vmem:[%s753 + $0x108] sm:%s745] %v788
                %v790 = vld [vmem:[%s752 + $0x90] sm:%s745]
                %791 = vst [vmem:[%s753 + $0x110] sm:%s745] %v790
                %v792 = vld [vmem:[%s752 + $0x98] sm:%s745]
                %793 = vst [vmem:[%s753 + $0x118] sm:%s745] %v792
                %v794 = vld [vmem:[%s752 + $0xa0] sm:%s745]
                %795 = vst [vmem:[%s753 + $0x120] sm:%s745] %v794
                %v796 = vld [vmem:[%s752 + $0xa8] sm:%s745]
                %797 = vst [vmem:[%s753 + $0x128] sm:%s745] %v796
                %v798 = vld [vmem:[%s752 + $0xb0] sm:%s745]
                %799 = vst [vmem:[%s753 + $0x130] sm:%s745] %v798
                %v800 = vld [vmem:[%s752 + $0xb8] sm:%s745]
                %801 = vst [vmem:[%s753 + $0x138] sm:%s745] %v800
                %v802 = vld [vmem:[%s752 + $0xc0] sm:%s745]
                %803 = vst [vmem:[%s753 + $0x140] sm:%s745] %v802
                %v804 = vld [vmem:[%s752 + $0xc8] sm:%s745]
                %805 = vst [vmem:[%s753 + $0x148] sm:%s745] %v804
                %v806 = vld [vmem:[%s752 + $0xd0] sm:%s745]
                %807 = vst [vmem:[%s753 + $0x150] sm:%s745] %v806
                %v808 = vld [vmem:[%s752 + $0xd8] sm:%s745]
                %809 = vst [vmem:[%s753 + $0x158] sm:%s745] %v808
                %v810 = vld [vmem:[%s752 + $0xe0] sm:%s745]
                %811 = vst [vmem:[%s753 + $0x160] sm:%s745] %v810
                %v812 = vld [vmem:[%s752 + $0xe8] sm:%s745]
                %813 = vst [vmem:[%s753 + $0x168] sm:%s745] %v812
                %v814 = vld [vmem:[%s752 + $0xf0] sm:%s745]
                %815 = vst [vmem:[%s753 + $0x170] sm:%s745] %v814
                %v816 = vld [vmem:[%s752 + $0xf8] sm:%s745]
                %817 = vst [vmem:[%s753 + $0x178] sm:%s745] %v816
                %v818 = vld [vmem:[%s752 + $0x100] sm:%s745]
                %819 = vst [vmem:[%s753 + $0x200] sm:%s745] %v818
                %v820 = vld [vmem:[%s752 + $0x108] sm:%s745]
                %821 = vst [vmem:[%s753 + $0x208] sm:%s745] %v820
                %v822 = vld [vmem:[%s752 + $0x110] sm:%s745]
                %823 = vst [vmem:[%s753 + $0x210] sm:%s745] %v822
                %v824 = vld [vmem:[%s752 + $0x118] sm:%s745]
                %825 = vst [vmem:[%s753 + $0x218] sm:%s745] %v824
                %v826 = vld [vmem:[%s752 + $0x120] sm:%s745]
                %827 = vst [vmem:[%s753 + $0x220] sm:%s745] %v826
                %v828 = vld [vmem:[%s752 + $0x128] sm:%s745]
                %829 = vst [vmem:[%s753 + $0x228] sm:%s745] %v828
                %v830 = vld [vmem:[%s752 + $0x130] sm:%s745]
                %831 = vst [vmem:[%s753 + $0x230] sm:%s745] %v830
                %v832 = vld [vmem:[%s752 + $0x138] sm:%s745]
                %833 = vst [vmem:[%s753 + $0x238] sm:%s745] %v832
                %v834 = vld [vmem:[%s752 + $0x140] sm:%s745]
                %835 = vst [vmem:[%s753 + $0x240] sm:%s745] %v834
                %v836 = vld [vmem:[%s752 + $0x148] sm:%s745]
                %837 = vst [vmem:[%s753 + $0x248] sm:%s745] %v836
                %v838 = vld [vmem:[%s752 + $0x150] sm:%s745]
                %839 = vst [vmem:[%s753 + $0x250] sm:%s745] %v838
                %v840 = vld [vmem:[%s752 + $0x158] sm:%s745]
                %841 = vst [vmem:[%s753 + $0x258] sm:%s745] %v840
                %v842 = vld [vmem:[%s752 + $0x160] sm:%s745]
                %843 = vst [vmem:[%s753 + $0x260] sm:%s745] %v842
                %v844 = vld [vmem:[%s752 + $0x168] sm:%s745]
                %845 = vst [vmem:[%s753 + $0x268] sm:%s745] %v844
                %v846 = vld [vmem:[%s752 + $0x170] sm:%s745]
                %847 = vst [vmem:[%s753 + $0x270] sm:%s745] %v846
                %v848 = vld [vmem:[%s752 + $0x178] sm:%s745]
                %849 = vst [vmem:[%s753 + $0x278] sm:%s745] %v848
              $region57: #{tpu_custom_call.1} parent=51 // loop_footer
                %s751 = sadd.s32 1, %s747
              $region58: #{tpu_custom_call.1} parent=51 // loop_footer_branch
                %746 = sbr.rel target = $region54
              $region59: #{tpu_custom_call.1} parent=51 // loop_exit
                _
            $region52: #{tpu_custom_call.1} parent=43 // pred_fallthru
              _
          $region44: #{tpu_custom_call.1} parent=39 // pred_fallthru
            _
          %958 = vnop
        $region40: #{tpu_custom_call.1} parent=35 // pred_fallthru
          _
        // Predicated region
        $region75: #{tpu_custom_call.1} parent=35 // pred_check
          %p959 = pneg %p157
        $region76: #{tpu_custom_call.1} parent=35 // pred_check_branch
          %961 = sbr.rel (%p959) target = $region78
        $region77: #{tpu_custom_call.1} parent=35 // pred_region
          %s962 = smul.u32 16, %s24
          %964 = vsyncadd %s723, 0
          %s965 = smul.addr %s962, 8
          %s966 = scalar_lea.hbm %s5, %s965
          %s967 = sshll.u32 %s726, 4
          %s968 = int_to_ptr.vmem [resolvable:$true] %s967
          %s969 = sshll.u32 %s966, 4
          %s970 = int_to_ptr.hbm [resolvable:$true] %s969
          %975 = dma.vmem_to_hbm [thread:$0]  %s968, 2048, %s970, %s723, 128, 128, 8
        $region78: #{tpu_custom_call.1} parent=35 // pred_fallthru
          _
        // Predicated region
        $region79: #{tpu_custom_call.1} parent=35 // pred_check
          %p976 = pneg %p183
        $region80: #{tpu_custom_call.1} parent=35 // pred_check_branch
          %978 = sbr.rel (%p976) target = $region82
        $region81: #{tpu_custom_call.1} parent=35 // pred_region
          %980 = vsyncadd %s728, 0
          %s981 = smul.addr %s24, 8
          %s982 = scalar_lea.hbm %s6, %s981
          %s984 = sshll.u32 %s731, 4
          %s985 = int_to_ptr.vmem [resolvable:$true] %s984
          %s986 = sshll.u32 %s982, 4
          %s987 = int_to_ptr.hbm [resolvable:$true] %s986
          %989 = dma.vmem_to_hbm [thread:$0]  %s985, 128, %s987, %s728
        $region82: #{tpu_custom_call.1} parent=35 // pred_fallthru
          _
      $region36: #{tpu_custom_call.1} parent=5 // pred_fallthru
        _
      %p990 = scmp.le.s32.totalorder 2, %s19
      // Predicated region
      $region83: #{tpu_custom_call.1} parent=5 // pred_check
        %p991 = pneg %p990
      $region84: #{tpu_custom_call.1} parent=5 // pred_check_branch
        %993 = sbr.rel (%p991) target = $region86
      $region85: #{tpu_custom_call.1} parent=5 // pred_region
        %s994 = ssub.s32 %s19, 2
        // Predicated region
        $region87: #{tpu_custom_call.1} parent=85 // pred_check
          %p995 = pneg %p137
        $region88: #{tpu_custom_call.1} parent=85 // pred_check_branch
          %997 = sbr.rel (%p995) target = $region90
        $region89: #{tpu_custom_call.1} parent=85 // pred_region
          %s998 = sand.u32 %s122, 1
          %s999 = sand.u32 %s122, 1
          %s1000 = smul.addr %s999, 384
          %s1001 = scalar_lea.vmem [#allocation2], %s1000
        $region90: #{tpu_custom_call.1} parent=85 // pred_fallthru
          _
        // Predicated region
        $region91: #{tpu_custom_call.1} parent=85 // pred_check
          %p1002 = pneg %p163
        $region92: #{tpu_custom_call.1} parent=85 // pred_check_branch
          %1004 = sbr.rel (%p1002) target = $region94
        $region93: #{tpu_custom_call.1} parent=85 // pred_region
          %s1005 = sand.u32 %s148, 1
          %s1006 = scalar_lea.sflag [#allocation4], %s1005
          %s1007 = sand.u32 %s148, 1
          %s1008 = smul.addr %s1007, 128
          %s1009 = scalar_lea.vmem [#allocation3], %s1008
          %1011 = dma.done %s1006, 2048
        $region94: #{tpu_custom_call.1} parent=85 // pred_fallthru
          _
        // Predicated region
        $region95: #{tpu_custom_call.1} parent=85 // pred_check
          %p1012 = pneg %p189
        $region96: #{tpu_custom_call.1} parent=85 // pred_check_branch
          %1014 = sbr.rel (%p1012) target = $region98
        $region97: #{tpu_custom_call.1} parent=85 // pred_region
          %s1015 = sand.u32 %s174, 1
          %s1016 = scalar_lea.sflag [#allocation6], %s1015
          %s1017 = sand.u32 %s174, 1
          %s1018 = smul.addr %s1017, 8
          %s1019 = scalar_lea.vmem [#allocation5], %s1018
          %1021 = dma.done %s1016, 128
        $region98: #{tpu_custom_call.1} parent=85 // pred_fallthru
          _
      $region86: #{tpu_custom_call.1} parent=5 // pred_fallthru
        _
    $region6: #{tpu_custom_call.1} parent=1 // loop_footer
      %s23 = sadd.s32 1, %s19
    $region7: #{tpu_custom_call.1} parent=1 // loop_footer_branch
      %18 = sbr.rel target = $region3
    $region8: #{tpu_custom_call.1} parent=1 // loop_exit
      _
    %1022 = vsyncpa [#allocation4], 1
    %s1023 = scalar_lea.sflag [#allocation4], 1
    %1024 = vsyncpa %s1023, 1
    %1025 = vsyncpa [#allocation6], 1
    %s1026 = scalar_lea.sflag [#allocation6], 1
    %1027 = vsyncpa %s1026, 1

</llo_original>
